<compile_context>
chip_gen: v7x
topology: tpu7x:2x2x1
jax: 0.10.0
libtpu: 0.0.40
codegen_flags: <defaults>
</compile_context>

<pallas_src>
import functools
import math

import jax
import jax.numpy as jnp
from jax.experimental import pallas as pl
from jax.experimental.pallas import tpu as pltpu


def _elu(x):
    # F.elu with alpha=1.0 (standard HGNN_AC activation).
    return jnp.where(x > 0, x, jnp.expm1(x))


def _round_up(x, m):
    return ((x + m - 1) // m) * m


def _choose_tile(n, target, align):
    """Tile size: a multiple of `align`, <= max(target rounded to align, align),
    never larger than n rounded up to align (we pad n to a multiple of the tile)."""
    t = max(align, (target // align) * align)
    return min(t, _round_up(n, align))


def _vmem_limit_bytes():
    # Generation-aware scoped-VMEM budget: ~75% of physical, capped at 96 MiB
    # (v5e/v6e: 128 MiB physical; v7x: 64 MiB per TensorCore).
    try:
        cap = pltpu.get_tpu_info().vmem_capacity_bytes
        return int(min(cap * 3 // 4, 96 * 1024 * 1024))
    except Exception:
        return 48 * 1024 * 1024


# ----------------------------------------------------------------------------------
# Projection kernel: y[h] = (x @ W[h] + b[h]) * scale  — head-major output [NH, N, H]
# ----------------------------------------------------------------------------------
def _proj_kernel(x_ref, w_ref, b_ref, o_ref, *, scale):
    y = jnp.dot(x_ref[...], w_ref[0], preferred_element_type=jnp.float32)
    y = y + b_ref[0]
    if scale != 1.0:
        y = y * scale
    o_ref[0] = y.astype(o_ref.dtype)


def _project(x, w, b, *, tile, scale, out_dtype, vmem_limit):
    n, d = x.shape
    nh, _, hd = w.shape
    grid = (nh, n // tile)
    return pl.pallas_call(
        functools.partial(_proj_kernel, scale=scale),
        out_shape=jax.ShapeDtypeStruct((nh, n, hd), out_dtype),
        grid_spec=pltpu.PrefetchScalarGridSpec(
            num_scalar_prefetch=0,
            grid=grid,
            in_specs=[
                pl.BlockSpec((tile, d), lambda hi, i: (i, 0)),     # node tile
                pl.BlockSpec((1, d, hd), lambda hi, i: (hi, 0, 0)),  # per-head W
                pl.BlockSpec((1, 1, hd), lambda hi, i: (hi, 0, 0)),  # per-head b
            ],
            out_specs=pl.BlockSpec((1, tile, hd), lambda hi, i: (hi, i, 0)),
        ),
        compiler_params=pltpu.CompilerParams(
            dimension_semantics=("parallel", "parallel"),
            vmem_limit_bytes=vmem_limit,
        ),
    )(x, w, b)


# ----------------------------------------------------------------------------------
# Flash-style multi-head cross-attention kernel (grid = dest tiles x src tiles)
# ----------------------------------------------------------------------------------
def hgnn_ac_flash_kernel(q_ref, k_ref, v_ref, out_ref,
                         m_scr, l_scr, acc_scr,
                         *, num_heads, n_src, src_tile):
    j = pl.program_id(1)          # src-tile (reduction) axis — stays sequential
    cdt = v_ref.dtype             # MXU operand dtype (f32 or bf16)

    @pl.when(j == 0)
    def _init():
        m_scr[...] = jnp.full(m_scr.shape, -jnp.inf, jnp.float32)
        l_scr[...] = jnp.zeros(l_scr.shape, jnp.float32)
        acc_scr[...] = jnp.zeros(acc_scr.shape, jnp.float32)

    # Mask padded src columns (only emitted when n_src is not a tile multiple).
    needs_mask = (n_src % src_tile) != 0
    if needs_mask:
        col = jax.lax.broadcasted_iota(jnp.int32, (1, src_tile), 1) + j * src_tile
        mask_bias = jnp.where(col < n_src, 0.0, -1e30).astype(jnp.float32)

    dn = (((1,), (1,)), ((), ()))   # contract last dims of q and k: no explicit k.T
    for h in range(num_heads):      # static unroll; leading-axis head indexing is free
        q = q_ref[h]                # [td, H]  (already scaled by 1/sqrt(H))
        k = k_ref[h]                # [ts, H]
        s = jax.lax.dot_general(q, k, dn, preferred_element_type=jnp.float32)  # [td, ts]
        if needs_mask:
            s = s + mask_bias
        m_prev = m_scr[h]                                              # [td, 1]
        m_new = jnp.maximum(m_prev, jnp.max(s, axis=-1, keepdims=True))
        alpha = jnp.exp(m_prev - m_new)
        p = jnp.exp(s - m_new)
        l_scr[h] = alpha * l_scr[h] + jnp.sum(p, axis=-1, keepdims=True)
        acc_scr[h] = alpha * acc_scr[h] + jnp.dot(
            p.astype(cdt), v_ref[h], preferred_element_type=jnp.float32)
        m_scr[h] = m_new
        # TODO(synk): attention dropout skipped (eval / training=False semantics).

    @pl.when(j == pl.num_programs(1) - 1)
    def _finalize():
        out = jnp.zeros(out_ref.shape, jnp.float32)
        for h in range(num_heads):
            # Deferred softmax normalization; approx reciprocal runs on the EUP slot.
            o_h = acc_scr[h] * pl.reciprocal(l_scr[h], approx=True)
            out = out + _elu(o_h)
        out_ref[...] = (out * (1.0 / num_heads)).astype(out_ref.dtype)


def hgnn_ac_forward(emb_dest, emb_src, feat_src, wq, bq, wk, bk, wv, bv,
                    *, dest_tile=512, src_tile=512,
                    compute_dtype=jnp.float32, min_dest_tiles=1):
    num_heads, in_dim, hidden = wq.shape
    n_dest, n_src = emb_dest.shape[0], emb_src.shape[0]
    scale = 1.0 / math.sqrt(float(hidden))
    vmem_limit = _vmem_limit_bytes()

    sub_align = 16 if compute_dtype == jnp.bfloat16 else 8   # bf16 packs 2 rows/sublane
    lane_align = 128                                          # MXU / lane width

    # --- tile selection + padded node counts -------------------------------------
    td = _choose_tile(n_dest, dest_tile, sub_align)
    n_dest_pad = _round_up(n_dest, td)
    # On v7x (2 TensorCores/chip) set min_dest_tiles=2 so the "parallel" dest axis
    # can load-balance across both cores.
    while n_dest_pad // td < min_dest_tiles and td > sub_align:
        td = max(sub_align, (td // 2 // sub_align) * sub_align)
        n_dest_pad = _round_up(n_dest, td)

    ts = _choose_tile(n_src, src_tile, lane_align)
    n_src_pad = _round_up(n_src, ts)

    def pad_rows(x, n):
        return x if x.shape[0] == n else jnp.pad(x, ((0, n - x.shape[0]), (0, 0)))

    ed = pad_rows(emb_dest.astype(compute_dtype), n_dest_pad)
    es = pad_rows(emb_src.astype(compute_dtype), n_src_pad)
    fs = pad_rows(feat_src.astype(compute_dtype), n_src_pad)

    # --- projections: computed ONCE (not per dest tile), head-major [NH, N, H] ----
    q = _project(ed, wq.astype(compute_dtype), bq.astype(jnp.float32),
                 tile=td, scale=scale, out_dtype=compute_dtype, vmem_limit=vmem_limit)
    k = _project(es, wk.astype(compute_dtype), bk.astype(jnp.float32),
                 tile=ts, scale=1.0, out_dtype=compute_dtype, vmem_limit=vmem_limit)
    v = _project(fs, wv.astype(compute_dtype), bv.astype(jnp.float32),
                 tile=ts, scale=1.0, out_dtype=compute_dtype, vmem_limit=vmem_limit)

    # --- flash attention over (dest tiles, src tiles) -----------------------------
    grid = (n_dest_pad // td, n_src_pad // ts)
    kernel = functools.partial(hgnn_ac_flash_kernel, num_heads=num_heads,
                               n_src=n_src, src_tile=ts)

    out = pl.pallas_call(
        kernel,
        out_shape=jax.ShapeDtypeStruct((n_dest_pad, hidden), jnp.float32),
        grid_spec=pltpu.PrefetchScalarGridSpec(
            num_scalar_prefetch=0,
            grid=grid,
            in_specs=[
                # Q block index is constant across j -> stays resident for the whole
                # src sweep (no re-DMA), re-fetched only when the dest tile changes.
                pl.BlockSpec((num_heads, td, hidden), lambda i, j: (0, i, 0)),
                pl.BlockSpec((num_heads, ts, hidden), lambda i, j: (0, j, 0)),
                pl.BlockSpec((num_heads, ts, hidden), lambda i, j: (0, j, 0)),
            ],
            out_specs=pl.BlockSpec((td, hidden), lambda i, j: (i, 0)),
            scratch_shapes=[
                pltpu.VMEM((num_heads, td, 1), jnp.float32),       # online-softmax max
                pltpu.VMEM((num_heads, td, 1), jnp.float32),       # online-softmax sum
                pltpu.VMEM((num_heads, td, hidden), jnp.float32),  # output accumulator
            ],
        ),
        compiler_params=pltpu.CompilerParams(
            # Dest tiles are independent -> megacore-parallel. Src axis accumulates
            # into scratch + the resident output block -> must stay sequential.
            dimension_semantics=("parallel", "arbitrary"),
            vmem_limit_bytes=vmem_limit,
        ),
    )(q, k, v)

    return out[:n_dest] if n_dest_pad != n_dest else out


# ----------------------------------------------------------------------------------
# Pure-JAX reference + test harness
# ----------------------------------------------------------------------------------
def hgnn_ac_reference(emb_dest, emb_src, feat_src, wq, bq, wk, bk, wv, bv):
    hidden = wq.shape[-1]
    outs = []
    for h in range(wq.shape[0]):
        q = emb_dest @ wq[h] + bq[h]
        k = emb_src @ wk[h] + bk[h]
        v = feat_src @ wv[h] + bv[h]
        a = jax.nn.softmax((q @ k.T) / math.sqrt(float(hidden)), axis=-1)
        outs.append(_elu(a @ v))
    return jnp.mean(jnp.stack(outs, axis=0), axis=0)


def _make_inputs(key, n_dest, n_src, num_heads, in_dim, hidden):
    ks = jax.random.split(key, 9)
    emb_dest = jax.random.normal(ks[0], (n_dest, in_dim), jnp.float32)
    emb_src = jax.random.normal(ks[1], (n_src, in_dim), jnp.float32)
    feat_src = jax.random.normal(ks[2], (n_src, hidden), jnp.float32)
    wq = jax.random.normal(ks[3], (num_heads, in_dim, hidden), jnp.float32) * 0.1
    bq = jax.random.normal(ks[4], (num_heads, 1, hidden), jnp.float32) * 0.1
    wk = jax.random.normal(ks[5], (num_heads, in_dim, hidden), jnp.float32) * 0.1
    bk = jax.random.normal(ks[6], (num_heads, 1, hidden), jnp.float32) * 0.1
    wv = jax.random.normal(ks[7], (num_heads, hidden, hidden), jnp.float32) * 0.1
    bv = jax.random.normal(ks[8], (num_heads, 1, hidden), jnp.float32) * 0.1
    return emb_dest, emb_src, feat_src, wq, bq, wk, bk, wv, bv


if __name__ == "__main__":
    num_heads, hidden = 2, 32
    key = jax.random.PRNGKey(0)
    k_small, k_big = jax.random.split(key)

    # --- 1) small demo shapes, f32, single padded+masked src tile -----------------
    args = _make_inputs(k_small, n_dest=8, n_src=16,
                        num_heads=num_heads, in_dim=32, hidden=hidden)
    ref = hgnn_ac_reference(*args)
    out = jax.block_until_ready(hgnn_ac_forward(*args))
    assert out.shape == (8, hidden)
    # tolerance accounts for the EUP approximate reciprocal in the softmax epilogue
    assert jnp.allclose(out, ref, rtol=1e-2, atol=1e-2)

    # --- 2) multi-tile both axes + src masking + dest padding, f32 ----------------
    args_big = _make_inputs(k_big, n_dest=40, n_src=300,
                            num_heads=num_heads, in_dim=48, hidden=hidden)
    ref_big = hgnn_ac_reference(*args_big)
    out_big = jax.block_until_ready(
        hgnn_ac_forward(*args_big, dest_tile=16, src_tile=128, min_dest_tiles=2))
    assert out_big.shape == (40, hidden)
    assert jnp.allclose(out_big, ref_big, rtol=1e-2, atol=1e-2)

    # --- 3) same shapes, bf16 MXU operands (f32 softmax / accumulators) -----------
    out_bf16 = jax.block_until_ready(
        hgnn_ac_forward(*args_big, dest_tile=16, src_tile=128,
                        compute_dtype=jnp.bfloat16))
    assert jnp.allclose(out_bf16, ref_big, rtol=5e-2, atol=5e-2)

    print("KERNEL_OK")
</pallas_src>

<mosaic_0001>
module attributes {stable_mosaic.version = 11 : i64} {
  func.func @_proj_kernel(%arg0: i32, %arg1: i32, %arg2: memref<8x32xf32, #tpu.memory_space<vmem>>, %arg3: memref<1x32x32xf32, #tpu.memory_space<vmem>>, %arg4: memref<1x1x32xf32, #tpu.memory_space<vmem>>, %arg5: memref<1x8x32xf32, #tpu.memory_space<vmem>>) attributes {dimension_semantics = [#tpu.dimension_semantics<parallel>, #tpu.dimension_semantics<parallel>], iteration_bounds = array<i64: 2, 1>, scalar_prefetch = 0 : i64, scratch_operands = 0 : i64, tpu.core_type = #tpu.core_type<tc>, window_params = [{transform_indices = @transform_0, window_bounds = array<i64: 8, 32>}, {transform_indices = @transform_1, window_bounds = array<i64: 1, 32, 32>}, {transform_indices = @transform_2, window_bounds = array<i64: 1, 1, 32>}, {transform_indices = @transform_3, window_bounds = array<i64: 1, 8, 32>}]} {
    %c0 = arith.constant 0 : index
    %c0_0 = arith.constant 0 : index
    %0 = vector.load %arg2[%c0, %c0_0] : memref<8x32xf32, #tpu.memory_space<vmem>>, vector<8x32xf32>
    %c0_1 = arith.constant 0 : index
    %c0_2 = arith.constant 0 : index
    %c0_3 = arith.constant 0 : index
    %1 = vector.load %arg3[%c0_1, %c0_2, %c0_3] : memref<1x32x32xf32, #tpu.memory_space<vmem>>, vector<1x32x32xf32>
    %2 = vector.shape_cast %1 : vector<1x32x32xf32> to vector<32x32xf32>
    %cst = arith.constant dense<0.000000e+00> : vector<8x32xf32>
    %3 = tpu.matmul %0, %2, %cst {dimension_numbers = #tpu.dot_dimension_numbers<[1], [0], [0], [1], [0, 0, 1, 1], [], []>} : vector<8x32xf32>, vector<32x32xf32>, vector<8x32xf32> -> vector<8x32xf32>
    %c0_4 = arith.constant 0 : index
    %c0_5 = arith.constant 0 : index
    %c0_6 = arith.constant 0 : index
    %4 = vector.load %arg4[%c0_4, %c0_5, %c0_6] : memref<1x1x32xf32, #tpu.memory_space<vmem>>, vector<1x1x32xf32>
    %5 = vector.shape_cast %4 : vector<1x1x32xf32> to vector<1x32xf32>
    %6 = vector.broadcast %5 : vector<1x32xf32> to vector<8x32xf32>
    %7 = arith.addf %3, %6 : vector<8x32xf32>
    %cst_7 = arith.constant 0.176776692 : f32
    %8 = vector.broadcast %cst_7 : f32 to vector<8x32xf32>
    %9 = arith.mulf %7, %8 : vector<8x32xf32>
    %c0_8 = arith.constant 0 : index
    %c0_9 = arith.constant 0 : index
    %c0_10 = arith.constant 0 : index
    %10 = vector.load %arg5[%c0_8, %c0_9, %c0_10] : memref<1x8x32xf32, #tpu.memory_space<vmem>>, vector<1x8x32xf32>
    %11 = vector.shape_cast %10 : vector<1x8x32xf32> to vector<8x32xf32>
    %12 = vector.shape_cast %9 : vector<8x32xf32> to vector<1x8x32xf32>
    tpu.vector_store %arg5[%c0_8, %c0_9, %c0_10], %12 {strides = array<i32>} : memref<1x8x32xf32, #tpu.memory_space<vmem>>, vector<1x8x32xf32>,
    return
  }
  func.func @transform_0(%arg0: i32, %arg1: i32) -> (i32, i32) {
    %c0_i32 = arith.constant 0 : i32
    %c0_i32_0 = arith.constant 0 : i32
    return %arg1, %c0_i32 : i32, i32
  }
  func.func @transform_1(%arg0: i32, %arg1: i32) -> (i32, i32, i32) {
    %c0_i32 = arith.constant 0 : i32
    %c0_i32_0 = arith.constant 0 : i32
    %c0_i32_1 = arith.constant 0 : i32
    return %arg0, %c0_i32, %c0_i32_0 : i32, i32, i32
  }
  func.func @transform_2(%arg0: i32, %arg1: i32) -> (i32, i32, i32) {
    %c0_i32 = arith.constant 0 : i32
    %c0_i32_0 = arith.constant 0 : i32
    %c0_i32_1 = arith.constant 0 : i32
    return %arg0, %c0_i32, %c0_i32_0 : i32, i32, i32
  }
  func.func @transform_3(%arg0: i32, %arg1: i32) -> (i32, i32, i32) {
    %c0_i32 = arith.constant 0 : i32
    %c0_i32_0 = arith.constant 0 : i32
    return %arg0, %arg1, %c0_i32 : i32, i32, i32
  }
}

</mosaic_0001>

<llo_original>
// kernel: tpu_custom_call.1
$region0: #{tpu_custom_call.1}
  #allocation0 [shape = 'u32[]', space=smem, size = 0x4, offset = 0x4, fixed_abs, tag = 'smem constant byte address 0x4 - core index']
  #allocation1 [shape = 'u32[144,128]{1,0:T(1,128)}', space=vmem, size = 0x12000, scoped, tag = 'internal scratch']
  %s0 = inlined_call_operand.hbm [shape: f32[8,32], index: 0, kind: input, shape index: {}]
  %s1 = inlined_call_operand.hbm [shape: f32[2,32,32], index: 1, kind: input, shape index: {}]
  %s2 = inlined_call_operand.vmem [shape: f32[2,1,32], index: 2, kind: input, shape index: {}]
  %s3 = inlined_call_operand.hbm [shape: f32[2,8,32], index: 3, kind: output, shape index: {}]
  %s4 = sld [smem:[#allocation0]]
  $region53: #{tpu_custom_call.1} parent=0
    _
  %s6 = ssub.s32 1, %s4
  %s7 = scalar_select 0, %s6, %s4
  $region1: #{tpu_custom_call.1} parent=0
    #allocation2 [shape = 'u8[4096]{0}', space=vmem, size = 0x1000, scoped, tag = 'input window, operand 0, single buffered']
    #allocation3 [shape = 's32[2]{0}', space=sflag, size = 0x8, scoped, tag = 'scoped memory for tpu_custom_call.1']
    #allocation4 [shape = 's32[2]{0}', space=sflag, size = 0x8, scoped, tag = 'scoped memory for tpu_custom_call.1']
    #allocation5 [shape = 'u8[32768]{0}', space=vmem, size = 0x8000, scoped, tag = 'input window, operand 1']
    #allocation6 [shape = 's32[2]{0}', space=sflag, size = 0x8, scoped, tag = 'scoped memory for tpu_custom_call.1']
    #allocation7 [shape = 'u8[8192]{0}', space=vmem, size = 0x2000, scoped, tag = 'output window, operand 0']
    %8 = vsyncpa [#allocation3], 0
    %9 = vsyncpa [#allocation6], 0
    %s10 = scalar_lea.sflag [#allocation6], 1
    %11 = vsyncpa %s10, 0
    %12 = vsyncpa [#allocation4], 0
    %s13 = scalar_lea.sflag [#allocation4], 1
    %14 = vsyncpa %s13, 0
    loop: start=0, step=1, limit=4
    $region2: #{tpu_custom_call.1} parent=1 // loop_pre_header
      _
    $region3: #{tpu_custom_call.1} parent=1 // loop_header
      %s16 = sphi 0, %s20
      %p17 = scmp.ge.s32.totalorder %s16, 4
      %s23 = sphi 0, %s35
      %s24 = sphi 0, %s31
      %s25 = sphi 0, %s23
      %s26 = sphi 0, %s24
      %s27 = sphi 0, %s25
      %s28 = sphi 0, %s26
      %s38 = sphi 0, %s40
      %s41 = sphi 0, %s38
      %s42 = sphi 0, %s41
      %s58 = sphi 0, %s42
      %s64 = sphi 0, %s66
      %s67 = sphi 0, %s64
      %s68 = sphi 0, %s67
      %s84 = sphi 0, %s68
      %s90 = sphi 0, %s92
      %s93 = sphi 0, %s90
      %s94 = sphi 0, %s93
      %s110 = sphi 0, %s94
      %s118 = sphi 0, %s120
      %s121 = sphi 0, %s118
      %s122 = sphi 0, %s121
      %s138 = sphi 0, %s122
    $region4: #{tpu_custom_call.1} parent=1 // loop_header_branch
      %19 = sbr.rel (%p17) target = $region8
    $region5: #{tpu_custom_call.1} parent=1 // loop_body
      %s21 = ssub.s32 %s16, 1
      %s22 = ssub.s32 %s16, 2
      %s29 = sadd.s32 1, %s24
      %p30 = scmp.ge.s32.totalorder %s29, 1
      %s31 = scalar_select %p30, 0, %s29
      %s32 = sadd.s32 1, %s23
      %s33 = scalar_select %p30, %s32, %s23
      %p34 = scmp.ge.s32.totalorder %s33, 2
      %s35 = scalar_select %p34, 0, %s33
      %s36 = ssub.s32 %s24, %s31
      %p37 = scmp.eq.s32.totalorder %s36, 0
      %s39 = sadd.s32 %s38, 1
      %s40 = scalar_select %p37, %s38, %s39
      %p43 = pneg %p37
      %p44 = scmp.eq.s32.totalorder %s16, 1
      %p45 = por %p43, %p44
      %p46 = scmp.ne.s32.totalorder %s38, %s41
      %p47 = scmp.eq.s32.totalorder %s16, 0
      %p48 = por %p46, %p47
      %p49 = scmp.ne.s32.totalorder %s38, %s41
      %p50 = scmp.eq.s32.totalorder %s21, 1
      %p51 = por %p49, %p50
      %p52 = scmp.ne.s32.totalorder %s41, %s42
      %p53 = scmp.eq.s32.totalorder %s21, 0
      %p54 = por %p52, %p53
      %p55 = scmp.ne.s32.totalorder %s41, %s42
      %p56 = scmp.eq.s32.totalorder %s22, 1
      %p57 = por %p55, %p56
      %p59 = scmp.ne.s32.totalorder %s42, %s58
      %p60 = scmp.eq.s32.totalorder %s22, 0
      %p61 = por %p59, %p60
      %s62 = ssub.s32 %s23, %s35
      %p63 = scmp.eq.s32.totalorder %s62, 0
      %s65 = sadd.s32 %s64, 1
      %s66 = scalar_select %p63, %s64, %s65
      %p69 = pneg %p63
      %p70 = scmp.eq.s32.totalorder %s16, 1
      %p71 = por %p69, %p70
      %p72 = scmp.ne.s32.totalorder %s64, %s67
      %p73 = scmp.eq.s32.totalorder %s16, 0
      %p74 = por %p72, %p73
      %p75 = scmp.ne.s32.totalorder %s64, %s67
      %p76 = scmp.eq.s32.totalorder %s21, 1
      %p77 = por %p75, %p76
      %p78 = scmp.ne.s32.totalorder %s67, %s68
      %p79 = scmp.eq.s32.totalorder %s21, 0
      %p80 = por %p78, %p79
      %p81 = scmp.ne.s32.totalorder %s67, %s68
      %p82 = scmp.eq.s32.totalorder %s22, 1
      %p83 = por %p81, %p82
      %p85 = scmp.ne.s32.totalorder %s68, %s84
      %p86 = scmp.eq.s32.totalorder %s22, 0
      %p87 = por %p85, %p86
      %s88 = ssub.s32 %s23, %s35
      %p89 = scmp.eq.s32.totalorder %s88, 0
      %s91 = sadd.s32 %s90, 1
      %s92 = scalar_select %p89, %s90, %s91
      %p95 = pneg %p89
      %p96 = scmp.eq.s32.totalorder %s16, 1
      %p97 = por %p95, %p96
      %p98 = scmp.ne.s32.totalorder %s90, %s93
      %p99 = scmp.eq.s32.totalorder %s16, 0
      %p100 = por %p98, %p99
      %p101 = scmp.ne.s32.totalorder %s90, %s93
      %p102 = scmp.eq.s32.totalorder %s21, 1
      %p103 = por %p101, %p102
      %p104 = scmp.ne.s32.totalorder %s93, %s94
      %p105 = scmp.eq.s32.totalorder %s21, 0
      %p106 = por %p104, %p105
      %p107 = scmp.ne.s32.totalorder %s93, %s94
      %p108 = scmp.eq.s32.totalorder %s22, 1
      %p109 = por %p107, %p108
      %p111 = scmp.ne.s32.totalorder %s94, %s110
      %p112 = scmp.eq.s32.totalorder %s22, 0
      %p113 = por %p111, %p112
      %s114 = ssub.s32 %s23, %s35
      %s115 = ssub.s32 %s24, %s31
      %s116 = sor.u32 %s114, %s115
      %p117 = scmp.eq.s32.totalorder %s116, 0
      %s119 = sadd.s32 %s118, 1
      %s120 = scalar_select %p117, %s118, %s119
      %p123 = pneg %p117
      %p124 = scmp.eq.s32.totalorder %s16, 1
      %p125 = por %p123, %p124
      %p126 = scmp.ne.s32.totalorder %s118, %s121
      %p127 = scmp.eq.s32.totalorder %s16, 0
      %p128 = por %p126, %p127
      %p129 = scmp.ne.s32.totalorder %s118, %s121
      %p130 = scmp.eq.s32.totalorder %s21, 1
      %p131 = por %p129, %p130
      %p132 = scmp.ne.s32.totalorder %s121, %s122
      %p133 = scmp.eq.s32.totalorder %s21, 0
      %p134 = por %p132, %p133
      %p135 = scmp.ne.s32.totalorder %s121, %s122
      %p136 = scmp.eq.s32.totalorder %s22, 1
      %p137 = por %p135, %p136
      %p139 = scmp.ne.s32.totalorder %s122, %s138
      %p140 = scmp.eq.s32.totalorder %s22, 0
      %p141 = por %p139, %p140
      %p142 = scmp.le.s32.totalorder 1, %s16
      %p143 = scmp.lt.s32.totalorder %s16, 3
      %p144 = pnand %p142, %p143
      %p145 = pneg %p144
      // Predicated region
      $region9: #{tpu_custom_call.1} parent=5 // pred_check
        _
      $region10: #{tpu_custom_call.1} parent=5 // pred_check_branch
        %147 = sbr.rel (%p144) target = $region12
      $region11: #{tpu_custom_call.1} parent=5 // pred_region
        %s148 = ssub.s32 %s16, 1
        // Predicated region
        $region13: #{tpu_custom_call.1} parent=11 // pred_check
          %p149 = pneg %p54
        $region14: #{tpu_custom_call.1} parent=11 // pred_check_branch
          %151 = sbr.rel (%p149) target = $region16
        $region15: #{tpu_custom_call.1} parent=11 // pred_region
          %s153 = ssub.s32 128, 128
          %154 = vsyncadd [#allocation3], %s153
          %s155 = smul.addr %s26, 128
          %s156 = scalar_lea.hbm %s0, %s155
          %s158 = sshll.u32 [#allocation2], 4
          %s159 = int_to_ptr.vmem [resolvable:$true] %s158
          %161 = dma.hbm_to_vmem [thread:$0]  %s156, 128, %s159, [#allocation3]
        $region16: #{tpu_custom_call.1} parent=11 // pred_fallthru
          _
      $region12: #{tpu_custom_call.1} parent=5 // pred_fallthru
        _
      %p162 = scmp.lt.s32.totalorder %s16, 2
      // Predicated region
      $region17: #{tpu_custom_call.1} parent=5 // pred_check
        %p163 = pneg %p162
      $region18: #{tpu_custom_call.1} parent=5 // pred_check_branch
        %165 = sbr.rel (%p163) target = $region20
      $region19: #{tpu_custom_call.1} parent=5 // pred_region
        // Predicated region
        $region21: #{tpu_custom_call.1} parent=19 // pred_check
          %p166 = pneg %p74
        $region22: #{tpu_custom_call.1} parent=19 // pred_check_branch
          %168 = sbr.rel (%p166) target = $region24
        $region23: #{tpu_custom_call.1} parent=19 // pred_region
          %s169 = sand.u32 %s64, 1
          %s170 = scalar_lea.sflag [#allocation6], %s169
          %s171 = sand.u32 %s64, 1
          %s172 = smul.addr %s171, 32
          %s173 = scalar_lea.vmem [#allocation5], %s172
          %s175 = ssub.s32 512, 512
          %176 = vsyncadd %s170, %s175
          %s177 = smul.addr %s23, 4
          %s178 = smul.addr %s177, 128
          %s179 = scalar_lea.hbm %s1, %s178
          %s180 = sshll.u32 %s173, 4
          %s181 = int_to_ptr.vmem [resolvable:$true] %s180
          %186 = dma.hbm_to_vmem [thread:$0]  %s179, 512, %s181, %s170, 128, 128, 8
        $region24: #{tpu_custom_call.1} parent=19 // pred_fallthru
          _
        // Predicated region
        $region25: #{tpu_custom_call.1} parent=19 // pred_check
          %p187 = pneg %p100
        $region26: #{tpu_custom_call.1} parent=19 // pred_check_branch
          %189 = sbr.rel (%p187) target = $region28
        $region27: #{tpu_custom_call.1} parent=19 // pred_region
          %p190 = scmp.lt.s32.totalorder %s23, 1
          %s191 = scalar_select %p190, %s23, 1
          %s192 = scalar_lea.vmem %s2, %s191
        $region28: #{tpu_custom_call.1} parent=19 // pred_fallthru
          _
      $region20: #{tpu_custom_call.1} parent=5 // pred_fallthru
        _
      %p193 = scmp.le.s32.totalorder 1, %s16
      %p194 = scmp.lt.s32.totalorder %s16, 3
      %p195 = pnand %p193, %p194
      %p196 = pneg %p195
      // Predicated region
      $region29: #{tpu_custom_call.1} parent=5 // pred_check
        _
      $region30: #{tpu_custom_call.1} parent=5 // pred_check_branch
        %198 = sbr.rel (%p195) target = $region32
      $region31: #{tpu_custom_call.1} parent=5 // pred_region
        %s199 = ssub.s32 %s16, 1
        // Predicated region
        $region33: #{tpu_custom_call.1} parent=31 // pred_check
          %p200 = pneg %p54
        $region34: #{tpu_custom_call.1} parent=31 // pred_check_branch
          %202 = sbr.rel (%p200) target = $region36
        $region35: #{tpu_custom_call.1} parent=31 // pred_region
          %203 = dma.done [#allocation3], 128
        $region36: #{tpu_custom_call.1} parent=31 // pred_fallthru
          _
        %s204 = sand.u32 %s67, 1
        %s205 = scalar_lea.sflag [#allocation6], %s204
        %s206 = sand.u32 %s67, 1
        %s207 = smul.addr %s206, 32
        %s208 = scalar_lea.vmem [#allocation5], %s207
        // Predicated region
        $region37: #{tpu_custom_call.1} parent=31 // pred_check
          %p209 = pneg %p80
        $region38: #{tpu_custom_call.1} parent=31 // pred_check_branch
          %211 = sbr.rel (%p209) target = $region40
        $region39: #{tpu_custom_call.1} parent=31 // pred_region
          %212 = dma.done %s205, 512
        $region40: #{tpu_custom_call.1} parent=31 // pred_fallthru
          _
        %p213 = pneg %p54
        %p214 = pneg %p51
        %s215 = sand.u32 %s67, 1
        %s216 = scalar_lea.sflag [#allocation6], %s215
        %s217 = sand.u32 %s67, 1
        %s218 = smul.addr %s217, 32
        %s219 = scalar_lea.vmem [#allocation5], %s218
        %p220 = pneg %p80
        %p221 = pneg %p77
        %p222 = scmp.lt.s32.totalorder %s25, 1
        %s223 = scalar_select %p222, %s25, 1
        %s224 = scalar_lea.vmem %s2, %s223
        %p225 = pneg %p106
        %p226 = pneg %p103
        %p227 = pneg %p134
        %p228 = pneg %p131
        %s229 = sand.u32 %s121, 1
        %s230 = scalar_lea.sflag [#allocation4], %s229
        %s231 = sand.u32 %s121, 1
        %s232 = smul.addr %s231, 8
        %s233 = scalar_lea.vmem [#allocation7], %s232
        %p234 = scmp.lt.s32.totalorder %s25, 1
        %s235 = scalar_select %p234, %s25, 1
        %s236 = scalar_lea.vmem %s2, %s235
        %v237 = vld [vmem:[#allocation2] sm:$0xff]
        %v238 = vld [vmem:[%s208] sm:$0xff]
        %v239 = vld [vmem:[%s208 + $0x8] sm:$0xff]
        %v240 = vld [vmem:[%s208 + $0x10] sm:$0xff]
        %v241 = vld [vmem:[%s208 + $0x18] sm:$0xff]
        %v242 = vld [vmem:[%s236] sm:$0x1]
        %v244 = vlaneseq
        %v245 = vshrl.u32 %v244, 7
        %v246 = vsub.s32 0, %v245
        %v247 = vrot.slane %v242, %v246
        %vm249 = vcmask 261120
        %v251 = vsel %vm249, %v237, 0
        %253 = vmatprep.subr.mxu0 0.0
        %254 = vmatpush1.msra.mxu0 %v238
        %255 = vmatprep.subr.mxu0 0.0
        %256 = vmatpush1.msra.mxu0 %v239
        %257 = vmatprep.subr.mxu0 0.0
        %258 = vmatpush1.msra.mxu0 %v240
        %259 = vmatprep.subr.mxu0 0.0
        %260 = vmatpush1.msra.mxu0 %v241
        %261 = vmatprep.subr.mxu0 0.0
        %262 = vmatpush1.msra.mxu0 0.0
        %263 = vmatprep.subr.mxu0 0.0
        %264 = vmatpush1.msra.mxu0 0.0
        %265 = vmatprep.subr.mxu0 0.0
        %266 = vmatpush1.msra.mxu0 0.0
        %267 = vmatprep.subr.mxu0 0.0
        %268 = vmatpush1.msra.mxu0 0.0
        %269 = vmatprep.subr.mxu0 0.0
        %270 = vmatpush1.msra.mxu0 0.0
        %271 = vmatprep.subr.mxu0 0.0
        %272 = vmatpush1.msra.mxu0 0.0
        %273 = vmatprep.subr.mxu0 0.0
        %274 = vmatpush1.msra.mxu0 0.0
        %275 = vmatprep.subr.mxu0 0.0
        %276 = vmatpush1.msra.mxu0 0.0
        %277 = vmatprep.subr.mxu0 0.0
        %278 = vmatpush1.msra.mxu0 0.0
        %279 = vmatprep.subr.mxu0 0.0
        %280 = vmatpush1.msra.mxu0 0.0
        %281 = vmatprep.subr.mxu0 0.0
        %282 = vmatpush1.msra.mxu0 0.0
        %283 = vmatprep.subr.mxu0 0.0
        %284 = vmatpush1.msra.mxu0 0.0
        %285 = vmatprep.subr.mxu0 0.0
        %286 = vmatpush1.msra.mxu0 0.0
        %287 = vmatprep.subr.mxu0 0.0
        %288 = vmatpush1.msra.mxu0 0.0
        %289 = vmatprep.subr.mxu0 0.0
        %290 = vmatpush1.msra.mxu0 0.0
        %291 = vmatprep.subr.mxu0 0.0
        %292 = vmatpush1.msra.mxu0 0.0
        %293 = vmatprep.subr.mxu0 0.0
        %294 = vmatpush1.msra.mxu0 0.0
        %295 = vmatprep.subr.mxu0 0.0
        %296 = vmatpush1.msra.mxu0 0.0
        %297 = vmatprep.subr.mxu0 0.0
        %298 = vmatpush1.msra.mxu0 0.0
        %299 = vmatprep.subr.mxu0 0.0
        %300 = vmatpush1.msra.mxu0 0.0
        %301 = vmatprep.subr.mxu0 0.0
        %302 = vmatpush1.msra.mxu0 0.0
        %303 = vmatprep.subr.mxu0 0.0
        %304 = vmatpush1.msra.mxu0 0.0
        %305 = vmatprep.subr.mxu0 0.0
        %306 = vmatpush1.msra.mxu0 0.0
        %307 = vmatprep.subr.mxu0 0.0
        %308 = vmatpush1.msra.mxu0 0.0
        %309 = vmatprep.subr.mxu0 0.0
        %310 = vmatpush1.msra.mxu0 0.0
        %311 = vmatprep.subr.mxu0 0.0
        %312 = vmatpush1.msra.mxu0 0.0
        %313 = vmatprep.subr.mxu0 0.0
        %314 = vmatpush1.msra.mxu0 0.0
        %315 = vmatprep.subr.mxu0 0.0
        %316 = vmatpush1.msra.mxu0 0.0
        %317 = vmatprep.mubr.f32.mxu0 0.0
        %318 = vmatmul.mubr.f32.gmra.mrb[0].mxu0 %v251
        %v319 = vpop.f32.mrb[0].mxu0
        %v320 = vadd.f32 %v247, %v319
        %v321 = vpop.f32.mrb[0].mxu0
        %322 = vdwg.mxu0
        %v323 = vmul.f32 %v320, 0.17677669
        %324 = vst.msk [vmem:[%s233] sm:$0xff] %vm249, %v323
        %s325 = sand.u32 %s121, 1
        %s326 = scalar_lea.sflag [#allocation4], %s325
        %s327 = sand.u32 %s121, 1
        %s328 = smul.addr %s327, 8
        %s329 = scalar_lea.vmem [#allocation7], %s328
        // Predicated region
        $region41: #{tpu_custom_call.1} parent=31 // pred_check
          %p330 = pneg %p131
        $region42: #{tpu_custom_call.1} parent=31 // pred_check_branch
          %332 = sbr.rel (%p330) target = $region44
        $region43: #{tpu_custom_call.1} parent=31 // pred_region
          %s334 = ssub.s32 128, 128
          %335 = vsyncadd %s326, %s334
          %s336 = sadd.s32 %s26, %s25
          %s337 = smul.addr %s336, 128
          %s338 = scalar_lea.hbm %s3, %s337
          %s340 = sshll.u32 %s329, 4
          %s341 = int_to_ptr.vmem [resolvable:$true] %s340
          %343 = dma.vmem_to_hbm [thread:$0]  %s341, 128, %s338, %s326
        $region44: #{tpu_custom_call.1} parent=31 // pred_fallthru
          _
      $region32: #{tpu_custom_call.1} parent=5 // pred_fallthru
        _
      %p344 = scmp.le.s32.totalorder 2, %s16
      // Predicated region
      $region45: #{tpu_custom_call.1} parent=5 // pred_check
        %p345 = pneg %p344
      $region46: #{tpu_custom_call.1} parent=5 // pred_check_branch
        %347 = sbr.rel (%p345) target = $region48
      $region47: #{tpu_custom_call.1} parent=5 // pred_region
        %s348 = ssub.s32 %s16, 2
        // Predicated region
        $region49: #{tpu_custom_call.1} parent=47 // pred_check
          %p349 = pneg %p137
        $region50: #{tpu_custom_call.1} parent=47 // pred_check_branch
          %351 = sbr.rel (%p349) target = $region52
        $region51: #{tpu_custom_call.1} parent=47 // pred_region
          %s352 = sand.u32 %s122, 1
          %s353 = scalar_lea.sflag [#allocation4], %s352
          %s354 = sand.u32 %s122, 1
          %s355 = smul.addr %s354, 8
          %s356 = scalar_lea.vmem [#allocation7], %s355
          %357 = dma.done %s353, 128
        $region52: #{tpu_custom_call.1} parent=47 // pred_fallthru
          _
      $region48: #{tpu_custom_call.1} parent=5 // pred_fallthru
        _
    $region6: #{tpu_custom_call.1} parent=1 // loop_footer
      %s20 = sadd.s32 1, %s16
    $region7: #{tpu_custom_call.1} parent=1 // loop_footer_branch
      %15 = sbr.rel target = $region3
    $region8: #{tpu_custom_call.1} parent=1 // loop_exit
      _
    %358 = vsyncpa [#allocation3], 1
    %s359 = scalar_lea.sflag [#allocation3], 1
    %360 = vsyncpa %s359, 1
    %361 = vsyncpa [#allocation6], 1
    %s362 = scalar_lea.sflag [#allocation6], 1
    %363 = vsyncpa %s362, 1
    %364 = vsyncpa [#allocation4], 1
    %s365 = scalar_lea.sflag [#allocation4], 1
    %366 = vsyncpa %s365, 1

</llo_original>
